<compile_context>
chip_gen: v7x
topology: tpu7x:2x2x1
jax: 0.10.0
libtpu: 0.0.40
codegen_flags: <defaults>
</compile_context>

<pallas_src>
import functools

import jax
import jax.numpy as jnp
from jax.experimental import pallas as pl
from jax.experimental.pallas import tpu as pltpu

_LANE = 128
_SUBLANE = 8
# Scoped-VMEM request; safe on v5e/v6e (128 MiB physical) and v7x (64 MiB/TC).
_VMEM_LIMIT_BYTES = 32 * 1024 * 1024
# Per-kernel double-buffered working-set budget used to size row tiles
# (kept comfortably below the scoped limit on every generation).
_TILE_BUDGET_BYTES = 20 * 1024 * 1024


def _round_up(n, m):
    return (n + m - 1) // m * m


def _pick_row_tile(rows, feat, n_tiled_arrays, itemsize=4, fixed_bytes=0,
                   max_tile=1024):
    """Largest row tile (multiple of 8, <= max_tile) whose double-buffered
    working set fits the VMEM budget, while keeping the grid >= 2 steps so the
    row axis can still be sharded across TensorCores (megacore / v7x)."""
    per_row = n_tiled_arrays * 2 * feat * itemsize        # 2 = double buffering
    budget = max(_TILE_BUDGET_BYTES - fixed_bytes, _SUBLANE * per_row)
    tile = min(max_tile, budget // per_row)
    rows_padded = _round_up(rows, _SUBLANE)
    if rows_padded >= 2 * _SUBLANE:                        # keep >= 2 grid steps
        tile = min(tile, rows_padded // 2)
    tile = max(_SUBLANE, (tile // _SUBLANE) * _SUBLANE)
    return min(tile, rows_padded)


def _pad_rows(x2d, row_tile):
    rows = x2d.shape[0]
    padded = _round_up(rows, row_tile)
    if padded != rows:
        x2d = jnp.pad(x2d, ((0, padded - rows), (0, 0)))
    return x2d


# ----------------------------- LayerNorm kernel -----------------------------

def _layernorm_kernel(x_ref, alpha_ref, bias_ref, o_ref, *, eps):
    x = x_ref[...].astype(jnp.float32)                       # (TR, F)
    feat = x.shape[-1]
    mean = jnp.mean(x, axis=-1, keepdims=True)
    diff = x - mean
    # torch.Tensor.std defaults to the unbiased estimator (ddof = 1).
    var = jnp.sum(diff * diff, axis=-1, keepdims=True) * (1.0 / (feat - 1))
    inv = pl.reciprocal(jnp.sqrt(var) + eps, approx=False)   # EUP, exact
    y = alpha_ref[...].astype(jnp.float32) * (diff * inv) \
        + bias_ref[...].astype(jnp.float32)
    o_ref[...] = y.astype(o_ref.dtype)


def layernorm_pallas(x2d, alpha, bias, *, eps=1e-5):
    rows, feat = x2d.shape
    row_tile = _pick_row_tile(rows, feat, n_tiled_arrays=2,
                              itemsize=x2d.dtype.itemsize)
    xp = _pad_rows(x2d, row_tile)
    grid = (xp.shape[0] // row_tile,)
    out = pl.pallas_call(
        functools.partial(_layernorm_kernel, eps=eps),
        out_shape=jax.ShapeDtypeStruct(xp.shape, x2d.dtype),
        grid_spec=pltpu.PrefetchScalarGridSpec(
            num_scalar_prefetch=0,
            grid=grid,
            in_specs=[
                pl.BlockSpec((row_tile, feat), lambda i: (i, 0)),
                pl.BlockSpec((1, feat), lambda i: (0, 0)),
                pl.BlockSpec((1, feat), lambda i: (0, 0)),
            ],
            out_specs=pl.BlockSpec((row_tile, feat), lambda i: (i, 0)),
        ),
        compiler_params=pltpu.CompilerParams(
            dimension_semantics=("parallel",),
            vmem_limit_bytes=_VMEM_LIMIT_BYTES),
    )(xp, alpha.reshape(1, feat), bias.reshape(1, feat))
    return out[:rows]


# --------------------------- Residual add kernel ----------------------------

def _residual_add_kernel(x_ref, y_ref, o_ref):
    o_ref[...] = x_ref[...] + y_ref[...]


def _residual_add_2d(x2d, y2d):
    rows, feat = x2d.shape
    row_tile = _pick_row_tile(rows, feat, n_tiled_arrays=3,
                              itemsize=x2d.dtype.itemsize)
    xp = _pad_rows(x2d, row_tile)
    yp = _pad_rows(y2d, row_tile)
    grid = (xp.shape[0] // row_tile,)
    out = pl.pallas_call(
        _residual_add_kernel,
        out_shape=jax.ShapeDtypeStruct(xp.shape, x2d.dtype),
        grid_spec=pltpu.PrefetchScalarGridSpec(
            num_scalar_prefetch=0,
            grid=grid,
            in_specs=[
                pl.BlockSpec((row_tile, feat), lambda i: (i, 0)),
                pl.BlockSpec((row_tile, feat), lambda i: (i, 0)),
            ],
            out_specs=pl.BlockSpec((row_tile, feat), lambda i: (i, 0)),
        ),
        # Result overwrites x's HBM buffer: no extra output allocation/copy.
        input_output_aliases={0: 0},
        compiler_params=pltpu.CompilerParams(
            dimension_semantics=("parallel",),
            vmem_limit_bytes=_VMEM_LIMIT_BYTES),
    )(xp, yp)
    return out[:rows]


def residual_add_pallas(x2d, y2d):
    rows, feat = x2d.shape
    # Purely elementwise: present a lane-dense (multiple-of-128) last dim so
    # stores are unmasked full-width vst when F itself is not lane aligned.
    if feat % _LANE != 0 and (rows * feat) % _LANE == 0:
        out = _residual_add_2d(x2d.reshape(-1, _LANE), y2d.reshape(-1, _LANE))
        return out.reshape(rows, feat)
    return _residual_add_2d(x2d, y2d)


# ---------------- Fused LN -> linear sublayer -> residual kernel ------------

def _fused_ln_linear_res_kernel(x_ref, wt_ref, b_ref, alpha_ref, bias_ref,
                                o_ref, *, eps):
    x = x_ref[...].astype(jnp.float32)                       # (TR, F)
    feat = x.shape[-1]
    mean = jnp.mean(x, axis=-1, keepdims=True)
    diff = x - mean
    var = jnp.sum(diff * diff, axis=-1, keepdims=True) * (1.0 / (feat - 1))
    inv = pl.reciprocal(jnp.sqrt(var) + eps, approx=False)
    y = alpha_ref[...].astype(jnp.float32) * (diff * inv) \
        + bias_ref[...].astype(jnp.float32)
    # sublayer(y) = y @ W^T + b   (wt_ref holds W^T, resident in VMEM)
    proj = jnp.dot(y, wt_ref[...].astype(jnp.float32),
                   preferred_element_type=jnp.float32)
    o_ref[...] = (x + proj + b_ref[...].astype(jnp.float32)).astype(o_ref.dtype)


def residual_connection_fused_linear(x, w, b, alpha, bias, *, eps=1e-5):
    """out = x + (LayerNorm(x) @ w.T + b) in a single pallas_call."""
    # TODO(synk): for large F (W^T > VMEM budget) tile W^T over an output-column
    # grid axis; here the whole weight stays resident.
    batch, seq, feat = x.shape
    x2d = x.reshape(batch * seq, feat)
    rows = x2d.shape[0]
    itemsize = x2d.dtype.itemsize
    fixed = 2 * feat * feat * itemsize + 6 * feat * itemsize   # resident W^T etc.
    row_tile = _pick_row_tile(rows, feat, n_tiled_arrays=2,
                              itemsize=itemsize, fixed_bytes=fixed)
    xp = _pad_rows(x2d, row_tile)
    grid = (xp.shape[0] // row_tile,)
    out = pl.pallas_call(
        functools.partial(_fused_ln_linear_res_kernel, eps=eps),
        out_shape=jax.ShapeDtypeStruct(xp.shape, x.dtype),
        grid_spec=pltpu.PrefetchScalarGridSpec(
            num_scalar_prefetch=0,
            grid=grid,
            in_specs=[
                pl.BlockSpec((row_tile, feat), lambda i: (i, 0)),  # x rows
                pl.BlockSpec((feat, feat), lambda i: (0, 0)),      # W^T
                pl.BlockSpec((1, feat), lambda i: (0, 0)),         # b
                pl.BlockSpec((1, feat), lambda i: (0, 0)),         # alpha
                pl.BlockSpec((1, feat), lambda i: (0, 0)),         # bias
            ],
            out_specs=pl.BlockSpec((row_tile, feat), lambda i: (i, 0)),
        ),
        input_output_aliases={0: 0},
        compiler_params=pltpu.CompilerParams(
            dimension_semantics=("parallel",),
            vmem_limit_bytes=_VMEM_LIMIT_BYTES),
    )(xp, w.T, b.reshape(1, feat), alpha.reshape(1, feat),
      bias.reshape(1, feat))
    return out[:rows].reshape(batch, seq, feat)


# --------------------------- ResidualConnection -----------------------------

def residual_connection(x, sublayer, alpha, bias, *, eps=1e-5):
    """General path: out = x + sublayer(LayerNorm(x)) for an opaque sublayer."""
    batch, seq, feat = x.shape
    x2d = x.reshape(batch * seq, feat)
    normed = layernorm_pallas(x2d, alpha, bias, eps=eps).reshape(batch, seq, feat)
    sub_out = sublayer(normed)                       # arbitrary callable (glue)
    out2d = residual_add_pallas(x2d, sub_out.reshape(batch * seq, feat))
    return out2d.reshape(batch, seq, feat)


# ------------------------------ Pure-JAX ref --------------------------------

def _layernorm_ref(x, alpha, bias, eps=1e-5):
    mean = jnp.mean(x, axis=-1, keepdims=True)
    feat = x.shape[-1]
    var = jnp.sum((x - mean) ** 2, axis=-1, keepdims=True) / (feat - 1)
    return alpha * (x - mean) / (jnp.sqrt(var) + eps) + bias


if __name__ == "__main__":
    B, S, F = 2, 16, 128          # lane-dense feature dim (multiple of 128)
    key = jax.random.PRNGKey(0)
    kx, kw, kb, ka, kc = jax.random.split(key, 5)

    x = jax.random.normal(kx, (B, S, F), dtype=jnp.float32)

    # LayerNorm params (non-trivial values to exercise the scale/shift path).
    alpha = 1.0 + 0.1 * jax.random.normal(ka, (F,), dtype=jnp.float32)
    bias = 0.1 * jax.random.normal(kc, (F,), dtype=jnp.float32)

    # Example sublayer: deterministic linear projection F -> F.
    w = 0.05 * jax.random.normal(kw, (F, F), dtype=jnp.float32)
    b = 0.05 * jax.random.normal(kb, (F,), dtype=jnp.float32)

    def sublayer(y):
        return jnp.dot(y, w.T, precision=jax.lax.Precision.HIGHEST) + b

    ref = x + sublayer(_layernorm_ref(x, alpha, bias))

    # General path (opaque sublayer): LN kernel + residual-add kernel.
    general = jax.jit(lambda xx: residual_connection(xx, sublayer, alpha, bias))
    out_general = jax.block_until_ready(general(x))

    # Fully fused path: LN -> matmul -> bias -> residual in one pallas_call.
    fused = jax.jit(lambda xx: residual_connection_fused_linear(
        xx, w, b, alpha, bias))
    out_fused = jax.block_until_ready(fused(x))

    assert out_general.shape == (B, S, F)
    assert out_fused.shape == (B, S, F)
    assert jnp.allclose(out_general, ref, atol=1e-4, rtol=1e-4), \
        "general path mismatch vs reference"
    assert jnp.allclose(out_fused, ref, atol=2e-3, rtol=2e-3), \
        "fused path mismatch vs reference"

    print("KERNEL_OK")
</pallas_src>

<mosaic_0001>
module attributes {stable_mosaic.version = 11 : i64} {
  func.func @_residual_add_kernel(%arg0: i32, %arg1: memref<16x128xf32, #tpu.memory_space<vmem>>, %arg2: memref<16x128xf32, #tpu.memory_space<vmem>>, %arg3: memref<16x128xf32, #tpu.memory_space<vmem>>) attributes {dimension_semantics = [#tpu.dimension_semantics<parallel>], iteration_bounds = array<i64: 2>, scalar_prefetch = 0 : i64, scratch_operands = 0 : i64, tpu.core_type = #tpu.core_type<tc>, window_params = [{transform_indices = @transform_0, window_bounds = array<i64: 16, 128>}, {transform_indices = @transform_1, window_bounds = array<i64: 16, 128>}, {transform_indices = @transform_2, window_bounds = array<i64: 16, 128>}]} {
    %c0 = arith.constant 0 : index
    %c0_0 = arith.constant 0 : index
    %0 = vector.load %arg1[%c0, %c0_0] : memref<16x128xf32, #tpu.memory_space<vmem>>, vector<16x128xf32>
    %c0_1 = arith.constant 0 : index
    %c0_2 = arith.constant 0 : index
    %1 = vector.load %arg2[%c0_1, %c0_2] : memref<16x128xf32, #tpu.memory_space<vmem>>, vector<16x128xf32>
    %2 = arith.addf %0, %1 : vector<16x128xf32>
    %c0_3 = arith.constant 0 : index
    %c0_4 = arith.constant 0 : index
    %3 = vector.load %arg3[%c0_3, %c0_4] : memref<16x128xf32, #tpu.memory_space<vmem>>, vector<16x128xf32>
    tpu.vector_store %arg3[%c0_3, %c0_4], %2 {strides = array<i32>} : memref<16x128xf32, #tpu.memory_space<vmem>>, vector<16x128xf32>,
    return
  }
  func.func @transform_0(%arg0: i32) -> (i32, i32) {
    %c0_i32 = arith.constant 0 : i32
    %c0_i32_0 = arith.constant 0 : i32
    return %arg0, %c0_i32 : i32, i32
  }
  func.func @transform_1(%arg0: i32) -> (i32, i32) {
    %c0_i32 = arith.constant 0 : i32
    %c0_i32_0 = arith.constant 0 : i32
    return %arg0, %c0_i32 : i32, i32
  }
  func.func @transform_2(%arg0: i32) -> (i32, i32) {
    %c0_i32 = arith.constant 0 : i32
    %c0_i32_0 = arith.constant 0 : i32
    return %arg0, %c0_i32 : i32, i32
  }
}

module attributes {stable_mosaic.version = 11 : i64} {
  func.func @_layernorm_kernel(%arg0: i32, %arg1: memref<16x128xf32, #tpu.memory_space<vmem>>, %arg2: memref<1x128xf32, #tpu.memory_space<vmem>>, %arg3: memref<1x128xf32, #tpu.memory_space<vmem>>, %arg4: memref<16x128xf32, #tpu.memory_space<vmem>>) attributes {dimension_semantics = [#tpu.dimension_semantics<parallel>], iteration_bounds = array<i64: 2>, scalar_prefetch = 0 : i64, scratch_operands = 0 : i64, tpu.core_type = #tpu.core_type<tc>, window_params = [{transform_indices = @transform_0, window_bounds = array<i64: 16, 128>}, {pipeline_mode = #tpu.pipeline_mode<synchronous>, transform_indices = @transform_1, window_bounds = array<i64: 1, 128>}, {pipeline_mode = #tpu.pipeline_mode<synchronous>, transform_indices = @transform_2, window_bounds = array<i64: 1, 128>}, {transform_indices = @transform_3, window_bounds = array<i64: 16, 128>}]} {
    %c0 = arith.constant 0 : index
    %c0_0 = arith.constant 0 : index
    %0 = vector.load %arg1[%c0, %c0_0] : memref<16x128xf32, #tpu.memory_space<vmem>>, vector<16x128xf32>
    %cst = arith.constant dense<0.000000e+00> : vector<16xf32>
    %1 = vector.multi_reduction <add>, %0, %cst [1] : vector<16x128xf32> to vector<16xf32>
    %2 = vector.shape_cast %1 : vector<16xf32> to vector<16x1xf32>
    %cst_1 = arith.constant 1.280000e+02 : f32
    %3 = vector.broadcast %cst_1 : f32 to vector<16x1xf32>
    %4 = arith.divf %2, %3 : vector<16x1xf32>
    %5 = vector.broadcast %4 : vector<16x1xf32> to vector<16x128xf32>
    %6 = arith.subf %0, %5 : vector<16x128xf32>
    %7 = arith.mulf %6, %6 : vector<16x128xf32>
    %cst_2 = arith.constant dense<0.000000e+00> : vector<16xf32>
    %8 = vector.multi_reduction <add>, %7, %cst_2 [1] : vector<16x128xf32> to vector<16xf32>
    %9 = vector.shape_cast %8 : vector<16xf32> to vector<16x1xf32>
    %cst_3 = arith.constant 0.00787401571 : f32
    %10 = vector.broadcast %cst_3 : f32 to vector<16x1xf32>
    %11 = arith.mulf %9, %10 : vector<16x1xf32>
    %12 = math.sqrt %11 : vector<16x1xf32>
    %cst_4 = arith.constant 9.99999974E-6 : f32
    %13 = vector.broadcast %cst_4 : f32 to vector<16x1xf32>
    %14 = arith.addf %12, %13 : vector<16x1xf32>
    %15 = tpu.reciprocal %14 : vector<16x1xf32> -> vector<16x1xf32>
    %c0_5 = arith.constant 0 : index
    %c0_6 = arith.constant 0 : index
    %16 = vector.load %arg2[%c0_5, %c0_6] : memref<1x128xf32, #tpu.memory_space<vmem>>, vector<1x128xf32>
    %17 = vector.broadcast %15 : vector<16x1xf32> to vector<16x128xf32>
    %18 = arith.mulf %6, %17 : vector<16x128xf32>
    %19 = vector.broadcast %16 : vector<1x128xf32> to vector<16x128xf32>
    %20 = arith.mulf %19, %18 : vector<16x128xf32>
    %c0_7 = arith.constant 0 : index
    %c0_8 = arith.constant 0 : index
    %21 = vector.load %arg3[%c0_7, %c0_8] : memref<1x128xf32, #tpu.memory_space<vmem>>, vector<1x128xf32>
    %22 = vector.broadcast %21 : vector<1x128xf32> to vector<16x128xf32>
    %23 = arith.addf %20, %22 : vector<16x128xf32>
    %c0_9 = arith.constant 0 : index
    %c0_10 = arith.constant 0 : index
    %24 = vector.load %arg4[%c0_9, %c0_10] : memref<16x128xf32, #tpu.memory_space<vmem>>, vector<16x128xf32>
    tpu.vector_store %arg4[%c0_9, %c0_10], %23 {strides = array<i32>} : memref<16x128xf32, #tpu.memory_space<vmem>>, vector<16x128xf32>,
    return
  }
  func.func @transform_0(%arg0: i32) -> (i32, i32) {
    %c0_i32 = arith.constant 0 : i32
    %c0_i32_0 = arith.constant 0 : i32
    return %arg0, %c0_i32 : i32, i32
  }
  func.func @transform_1(%arg0: i32) -> (i32, i32) {
    %c0_i32 = arith.constant 0 : i32
    %c0_i32_0 = arith.constant 0 : i32
    %c0_i32_1 = arith.constant 0 : i32
    return %c0_i32, %c0_i32_0 : i32, i32
  }
  func.func @transform_2(%arg0: i32) -> (i32, i32) {
    %c0_i32 = arith.constant 0 : i32
    %c0_i32_0 = arith.constant 0 : i32
    %c0_i32_1 = arith.constant 0 : i32
    return %c0_i32, %c0_i32_0 : i32, i32
  }
  func.func @transform_3(%arg0: i32) -> (i32, i32) {
    %c0_i32 = arith.constant 0 : i32
    %c0_i32_0 = arith.constant 0 : i32
    return %arg0, %c0_i32 : i32, i32
  }
}

</mosaic_0001>

<llo_original>
// kernel: _lambda_.2
$region0: #{_lambda_.2}
  #allocation0 [shape = 'u32[]', space=smem, size = 0x4, offset = 0x4, fixed_abs, tag = 'smem constant byte address 0x4 - core index']
  #allocation1 [shape = 'u32[144,128]{1,0:T(1,128)}', space=vmem, size = 0x12000, scoped, tag = 'internal scratch']
  %s0 = inlined_call_operand.vmem [shape: f32[32,128], index: 0, kind: input, shape index: {}]
  %s1 = inlined_call_operand.vmem [shape: f32[1,128], index: 1, kind: input, shape index: {}]
  %s2 = inlined_call_operand.vmem [shape: f32[1,128], index: 2, kind: input, shape index: {}]
  %s3 = inlined_call_operand.vmem [shape: f32[32,128], index: 3, kind: output, shape index: {}]
  %s4 = sld [smem:[#allocation0]]
  $region45: #{_lambda_.2} parent=0
    _
  %s6 = ssub.s32 1, %s4
  %s7 = scalar_select 0, %s6, %s4
  loop: start=0, step=1, limit=4
  $region2: #{_lambda_.2} parent=0 // loop_pre_header
    _
  $region3: #{_lambda_.2} parent=0 // loop_header
    %s9 = sphi 0, %s13
    %p10 = scmp.ge.s32.totalorder %s9, 4
    %s19 = sphi 0, %s21
    %s22 = sphi 0, %s19
    %s23 = sphi 0, %s22
    %s39 = sphi 0, %s23
    %s43 = sphi 0, %s43
    %s45 = sphi 0, %s43
    %s46 = sphi 0, %s45
    %s60 = sphi 0, %s46
    %s64 = sphi 0, %s64
    %s66 = sphi 0, %s64
    %s67 = sphi 0, %s66
    %s81 = sphi 0, %s67
    %s87 = sphi 0, %s89
    %s90 = sphi 0, %s87
    %s91 = sphi 0, %s90
    %s107 = sphi 0, %s91
  $region4: #{_lambda_.2} parent=0 // loop_header_branch
    %12 = sbr.rel (%p10) target = $region8
  $region5: #{_lambda_.2} parent=0 // loop_body
    %s14 = ssub.s32 %s9, 1
    %s15 = ssub.s32 %s9, 2
    %s16 = sadd.s32 %s9, 1
    %s17 = ssub.s32 %s9, %s16
    %p18 = scmp.eq.s32.totalorder %s17, 0
    %s20 = sadd.s32 %s19, 1
    %s21 = scalar_select %p18, %s19, %s20
    %p24 = pneg %p18
    %p25 = scmp.eq.s32.totalorder %s9, 1
    %p26 = por %p24, %p25
    %p27 = scmp.ne.s32.totalorder %s19, %s22
    %p28 = scmp.eq.s32.totalorder %s9, 0
    %p29 = por %p27, %p28
    %p30 = scmp.ne.s32.totalorder %s19, %s22
    %p31 = scmp.eq.s32.totalorder %s14, 1
    %p32 = por %p30, %p31
    %p33 = scmp.ne.s32.totalorder %s22, %s23
    %p34 = scmp.eq.s32.totalorder %s14, 0
    %p35 = por %p33, %p34
    %p36 = scmp.ne.s32.totalorder %s22, %s23
    %p37 = scmp.eq.s32.totalorder %s15, 1
    %p38 = por %p36, %p37
    %p40 = scmp.ne.s32.totalorder %s23, %s39
    %p41 = scmp.eq.s32.totalorder %s15, 0
    %p42 = por %p40, %p41
    %s44 = sadd.s32 %s43, 1
    %p47 = scmp.eq.s32.totalorder %s9, 1
    %p48 = scmp.ne.s32.totalorder %s43, %s45
    %p49 = scmp.eq.s32.totalorder %s9, 0
    %p50 = por %p48, %p49
    %p51 = scmp.ne.s32.totalorder %s43, %s45
    %p52 = scmp.eq.s32.totalorder %s14, 1
    %p53 = por %p51, %p52
    %p54 = scmp.ne.s32.totalorder %s45, %s46
    %p55 = scmp.eq.s32.totalorder %s14, 0
    %p56 = por %p54, %p55
    %p57 = scmp.ne.s32.totalorder %s45, %s46
    %p58 = scmp.eq.s32.totalorder %s15, 1
    %p59 = por %p57, %p58
    %p61 = scmp.ne.s32.totalorder %s46, %s60
    %p62 = scmp.eq.s32.totalorder %s15, 0
    %p63 = por %p61, %p62
    %s65 = sadd.s32 %s64, 1
    %p68 = scmp.eq.s32.totalorder %s9, 1
    %p69 = scmp.ne.s32.totalorder %s64, %s66
    %p70 = scmp.eq.s32.totalorder %s9, 0
    %p71 = por %p69, %p70
    %p72 = scmp.ne.s32.totalorder %s64, %s66
    %p73 = scmp.eq.s32.totalorder %s14, 1
    %p74 = por %p72, %p73
    %p75 = scmp.ne.s32.totalorder %s66, %s67
    %p76 = scmp.eq.s32.totalorder %s14, 0
    %p77 = por %p75, %p76
    %p78 = scmp.ne.s32.totalorder %s66, %s67
    %p79 = scmp.eq.s32.totalorder %s15, 1
    %p80 = por %p78, %p79
    %p82 = scmp.ne.s32.totalorder %s67, %s81
    %p83 = scmp.eq.s32.totalorder %s15, 0
    %p84 = por %p82, %p83
    %s85 = ssub.s32 %s9, %s16
    %p86 = scmp.eq.s32.totalorder %s85, 0
    %s88 = sadd.s32 %s87, 1
    %s89 = scalar_select %p86, %s87, %s88
    %p92 = pneg %p86
    %p93 = scmp.eq.s32.totalorder %s9, 1
    %p94 = por %p92, %p93
    %p95 = scmp.ne.s32.totalorder %s87, %s90
    %p96 = scmp.eq.s32.totalorder %s9, 0
    %p97 = por %p95, %p96
    %p98 = scmp.ne.s32.totalorder %s87, %s90
    %p99 = scmp.eq.s32.totalorder %s14, 1
    %p100 = por %p98, %p99
    %p101 = scmp.ne.s32.totalorder %s90, %s91
    %p102 = scmp.eq.s32.totalorder %s14, 0
    %p103 = por %p101, %p102
    %p104 = scmp.ne.s32.totalorder %s90, %s91
    %p105 = scmp.eq.s32.totalorder %s15, 1
    %p106 = por %p104, %p105
    %p108 = scmp.ne.s32.totalorder %s91, %s107
    %p109 = scmp.eq.s32.totalorder %s15, 0
    %p110 = por %p108, %p109
    %p111 = scmp.le.s32.totalorder 1, %s9
    %p112 = scmp.lt.s32.totalorder %s9, 3
    %p113 = pnand %p111, %p112
    %p114 = pneg %p113
    // Predicated region
    $region9: #{_lambda_.2} parent=5 // pred_check
      _
    $region10: #{_lambda_.2} parent=5 // pred_check_branch
      %116 = sbr.rel (%p113) target = $region12
    $region11: #{_lambda_.2} parent=5 // pred_region
      %s117 = ssub.s32 %s9, 1
      // Predicated region
      $region13: #{_lambda_.2} parent=11 // pred_check
        %p118 = pneg %p56
      $region14: #{_lambda_.2} parent=11 // pred_check_branch
        %120 = sbr.rel (%p118) target = $region16
      $region15: #{_lambda_.2} parent=11 // pred_region
        _
      $region16: #{_lambda_.2} parent=11 // pred_fallthru
        _
      // Predicated region
      $region17: #{_lambda_.2} parent=11 // pred_check
        %p121 = pneg %p77
      $region18: #{_lambda_.2} parent=11 // pred_check_branch
        %123 = sbr.rel (%p121) target = $region20
      $region19: #{_lambda_.2} parent=11 // pred_region
        _
      $region20: #{_lambda_.2} parent=11 // pred_fallthru
        _
    $region12: #{_lambda_.2} parent=5 // pred_fallthru
      _
    %p124 = scmp.lt.s32.totalorder %s9, 2
    // Predicated region
    $region21: #{_lambda_.2} parent=5 // pred_check
      %p125 = pneg %p124
    $region22: #{_lambda_.2} parent=5 // pred_check_branch
      %127 = sbr.rel (%p125) target = $region24
    $region23: #{_lambda_.2} parent=5 // pred_region
      // Predicated region
      $region25: #{_lambda_.2} parent=23 // pred_check
        %p128 = pneg %p29
      $region26: #{_lambda_.2} parent=23 // pred_check_branch
        %130 = sbr.rel (%p128) target = $region28
      $region27: #{_lambda_.2} parent=23 // pred_region
        %s131 = smul.u32 2, %s9
        %p132 = scmp.lt.s32.totalorder %s131, 3
        %s133 = scalar_select %p132, %s131, 3
        %s134 = smul.addr %s133, 8
        %s135 = scalar_lea.vmem %s0, %s134
        %s136 = smul.u32 2, %s9
      $region28: #{_lambda_.2} parent=23 // pred_fallthru
        _
    $region24: #{_lambda_.2} parent=5 // pred_fallthru
      _
    %p137 = scmp.le.s32.totalorder 1, %s9
    %p138 = scmp.lt.s32.totalorder %s9, 3
    %p139 = pnand %p137, %p138
    %p140 = pneg %p139
    // Predicated region
    $region29: #{_lambda_.2} parent=5 // pred_check
      _
    $region30: #{_lambda_.2} parent=5 // pred_check_branch
      %142 = sbr.rel (%p139) target = $region32
    $region31: #{_lambda_.2} parent=5 // pred_region
      %s143 = ssub.s32 %s9, 1
      %s144 = smul.u32 2, %s14
      %p145 = scmp.lt.s32.totalorder %s144, 3
      %s146 = scalar_select %p145, %s144, 3
      %s147 = smul.addr %s146, 8
      %s148 = scalar_lea.vmem %s0, %s147
      %p149 = pneg %p35
      %p150 = pneg %p32
      %p151 = pneg %p56
      %p152 = pneg %p53
      %p153 = pneg %p77
      %p154 = pneg %p74
      %p155 = pneg %p103
      %p156 = pneg %p100
      %s157 = smul.u32 2, %s14
      %p158 = scmp.lt.s32.totalorder %s157, 3
      %s159 = scalar_select %p158, %s157, 3
      %s160 = smul.addr %s159, 8
      %s161 = scalar_lea.vmem %s3, %s160
      %s162 = smul.u32 2, %s14
      %p163 = scmp.lt.s32.totalorder %s162, 3
      %s164 = scalar_select %p163, %s162, 3
      %s165 = smul.addr %s164, 8
      %s166 = scalar_lea.vmem %s0, %s165
      %s167 = smul.u32 2, %s14
      %s168 = smul.u32 2, %s14
      %p169 = scmp.lt.s32.totalorder %s168, 3
      %s170 = scalar_select %p169, %s168, 3
      %s171 = smul.addr %s170, 8
      %s172 = scalar_lea.vmem %s3, %s171
      %s173 = smul.u32 2, %s14
      %v174 = vld [vmem:[%s166] sm:$0xff]
      %v175 = vld [vmem:[%s166 + $0x8] sm:$0xff]
      %176 = vadd.xlane.f32.xlu0 %v174
      %v177 = vpop.xlane.xlu0 %176
      %178 = vadd.xlane.f32.xlu0 %v175
      %v179 = vpop.xlane.xlu0 %178
      %v180 = vrcp.pop 128.0
      %v181 = vmul.f32 %v177, %v180
      %v182 = vmul.f32 %v179, %v180
      %v183 = vsub.f32 %v174, %v181
      %v184 = vsub.f32 %v175, %v182
      %v185 = vmul.f32 %v183, %v183
      %v186 = vmul.f32 %v184, %v184
      %187 = vadd.xlane.f32.xlu0 %v185
      %v188 = vpop.xlane.xlu0 %187
      %189 = vadd.xlane.f32.xlu0 %v186
      %v190 = vpop.xlane.xlu0 %189
      %v191 = vmul.f32 %v188, 0.007874016
      %v192 = vmul.f32 %v190, 0.007874016
      %v193 = vrsqrt.pop %v191
      %v194 = vmul.f32 %v191, %v193
      %vm195 = vcmp.eq.f32.partialorder %v191, inf
      %v196 = vsel %vm195, %v191, %v194
      %vm197 = vcmp.eq.f32.partialorder %v191, 0.0
      %v198 = vand.u32 %v191, 2147483648
      %v199 = vsel %vm197, %v198, %v196
      %v200 = vrsqrt.pop %v192
      %v201 = vmul.f32 %v192, %v200
      %vm202 = vcmp.eq.f32.partialorder %v192, inf
      %v203 = vsel %vm202, %v192, %v201
      %vm204 = vcmp.eq.f32.partialorder %v192, 0.0
      %v205 = vand.u32 %v192, 2147483648
      %v206 = vsel %vm204, %v205, %v203
      %v207 = vadd.f32 %v199, 1e-05
      %v208 = vadd.f32 %v206, 1e-05
      %v209 = vrcp.pop %v207
      %v210 = vrcp.pop %v208
      %v211 = vld [vmem:[%s1] sm:$0x1]
      %v212 = vmul.f32 %v183, %v209
      %v213 = vmul.f32 %v184, %v210
      %v215 = vlaneseq
      %v216 = vshrl.u32 %v215, 7
      %v217 = vsub.s32 0, %v216
      %v218 = vrot.slane %v211, %v217
      %v220 = vmul.f32 %v218, %v212
      %v221 = vmul.f32 %v218, %v213
      %v222 = vld [vmem:[%s2] sm:$0x1]
      %v224 = vlaneseq
      %v225 = vshrl.u32 %v224, 7
      %v226 = vsub.s32 0, %v225
      %v227 = vrot.slane %v222, %v226
      %v229 = vadd.f32 %v220, %v227
      %v230 = vadd.f32 %v221, %v227
      %231 = vst [vmem:[%s172] sm:$0xff] %v229
      %232 = vst [vmem:[%s172 + $0x8] sm:$0xff] %v230
      %s233 = smul.u32 2, %s14
      %p234 = scmp.lt.s32.totalorder %s233, 3
      %s235 = scalar_select %p234, %s233, 3
      %s236 = smul.addr %s235, 8
      %s237 = scalar_lea.vmem %s3, %s236
      // Predicated region
      $region33: #{_lambda_.2} parent=31 // pred_check
        %p238 = pneg %p100
      $region34: #{_lambda_.2} parent=31 // pred_check_branch
        %240 = sbr.rel (%p238) target = $region36
      $region35: #{_lambda_.2} parent=31 // pred_region
        %s241 = smul.u32 2, %s14
      $region36: #{_lambda_.2} parent=31 // pred_fallthru
        _
    $region32: #{_lambda_.2} parent=5 // pred_fallthru
      _
    %p242 = scmp.le.s32.totalorder 2, %s9
    // Predicated region
    $region37: #{_lambda_.2} parent=5 // pred_check
      %p243 = pneg %p242
    $region38: #{_lambda_.2} parent=5 // pred_check_branch
      %245 = sbr.rel (%p243) target = $region40
    $region39: #{_lambda_.2} parent=5 // pred_region
      %s246 = ssub.s32 %s9, 2
      // Predicated region
      $region41: #{_lambda_.2} parent=39 // pred_check
        %p247 = pneg %p106
      $region42: #{_lambda_.2} parent=39 // pred_check_branch
        %249 = sbr.rel (%p247) target = $region44
      $region43: #{_lambda_.2} parent=39 // pred_region
        %s250 = smul.u32 2, %s15
        %p251 = scmp.lt.s32.totalorder %s250, 3
        %s252 = scalar_select %p251, %s250, 3
        %s253 = smul.addr %s252, 8
        %s254 = scalar_lea.vmem %s3, %s253
      $region44: #{_lambda_.2} parent=39 // pred_fallthru
        _
    $region40: #{_lambda_.2} parent=5 // pred_fallthru
      _
  $region6: #{_lambda_.2} parent=0 // loop_footer
    %s13 = sadd.s32 1, %s9
  $region7: #{_lambda_.2} parent=0 // loop_footer_branch
    %8 = sbr.rel target = $region3
  $region8: #{_lambda_.2} parent=0 // loop_exit
    _

// kernel: _lambda_.3
$region0: #{_lambda_.3}
  #allocation0 [shape = 'u32[]', space=smem, size = 0x4, offset = 0x4, fixed_abs, tag = 'smem constant byte address 0x4 - core index']
  #allocation1 [shape = 'u32[144,128]{1,0:T(1,128)}', space=vmem, size = 0x12000, scoped, tag = 'internal scratch']
  %s0 = inlined_call_operand.vmem [shape: f32[32,128], index: 0, kind: input, shape index: {}, may-alias: {0,2}]
  %s1 = inlined_call_operand.vmem [shape: f32[32,128], index: 1, kind: input, shape index: {}]
  %s2 = inlined_call_operand.vmem [shape: f32[32,128], index: 2, kind: output, shape index: {}, may-alias: {0,2}]
  %s3 = sld [smem:[#allocation0]]
  $region41: #{_lambda_.3} parent=0
    _
  %s5 = ssub.s32 1, %s3
  %s6 = scalar_select 0, %s5, %s3
  loop: start=0, step=1, limit=4
  $region2: #{_lambda_.3} parent=0 // loop_pre_header
    _
  $region3: #{_lambda_.3} parent=0 // loop_header
    %s8 = sphi 0, %s12
    %p9 = scmp.ge.s32.totalorder %s8, 4
    %s18 = sphi 0, %s20
    %s21 = sphi 0, %s18
    %s22 = sphi 0, %s21
    %s38 = sphi 0, %s22
    %s44 = sphi 0, %s46
    %s47 = sphi 0, %s44
    %s48 = sphi 0, %s47
    %s64 = sphi 0, %s48
    %s70 = sphi 0, %s72
    %s73 = sphi 0, %s70
    %s74 = sphi 0, %s73
    %s90 = sphi 0, %s74
  $region4: #{_lambda_.3} parent=0 // loop_header_branch
    %11 = sbr.rel (%p9) target = $region8
  $region5: #{_lambda_.3} parent=0 // loop_body
    %s13 = ssub.s32 %s8, 1
    %s14 = ssub.s32 %s8, 2
    %s15 = sadd.s32 %s8, 1
    %s16 = ssub.s32 %s8, %s15
    %p17 = scmp.eq.s32.totalorder %s16, 0
    %s19 = sadd.s32 %s18, 1
    %s20 = scalar_select %p17, %s18, %s19
    %p23 = pneg %p17
    %p24 = scmp.eq.s32.totalorder %s8, 1
    %p25 = por %p23, %p24
    %p26 = scmp.ne.s32.totalorder %s18, %s21
    %p27 = scmp.eq.s32.totalorder %s8, 0
    %p28 = por %p26, %p27
    %p29 = scmp.ne.s32.totalorder %s18, %s21
    %p30 = scmp.eq.s32.totalorder %s13, 1
    %p31 = por %p29, %p30
    %p32 = scmp.ne.s32.totalorder %s21, %s22
    %p33 = scmp.eq.s32.totalorder %s13, 0
    %p34 = por %p32, %p33
    %p35 = scmp.ne.s32.totalorder %s21, %s22
    %p36 = scmp.eq.s32.totalorder %s14, 1
    %p37 = por %p35, %p36
    %p39 = scmp.ne.s32.totalorder %s22, %s38
    %p40 = scmp.eq.s32.totalorder %s14, 0
    %p41 = por %p39, %p40
    %s42 = ssub.s32 %s8, %s15
    %p43 = scmp.eq.s32.totalorder %s42, 0
    %s45 = sadd.s32 %s44, 1
    %s46 = scalar_select %p43, %s44, %s45
    %p49 = pneg %p43
    %p50 = scmp.eq.s32.totalorder %s8, 1
    %p51 = por %p49, %p50
    %p52 = scmp.ne.s32.totalorder %s44, %s47
    %p53 = scmp.eq.s32.totalorder %s8, 0
    %p54 = por %p52, %p53
    %p55 = scmp.ne.s32.totalorder %s44, %s47
    %p56 = scmp.eq.s32.totalorder %s13, 1
    %p57 = por %p55, %p56
    %p58 = scmp.ne.s32.totalorder %s47, %s48
    %p59 = scmp.eq.s32.totalorder %s13, 0
    %p60 = por %p58, %p59
    %p61 = scmp.ne.s32.totalorder %s47, %s48
    %p62 = scmp.eq.s32.totalorder %s14, 1
    %p63 = por %p61, %p62
    %p65 = scmp.ne.s32.totalorder %s48, %s64
    %p66 = scmp.eq.s32.totalorder %s14, 0
    %p67 = por %p65, %p66
    %s68 = ssub.s32 %s8, %s15
    %p69 = scmp.eq.s32.totalorder %s68, 0
    %s71 = sadd.s32 %s70, 1
    %s72 = scalar_select %p69, %s70, %s71
    %p75 = pneg %p69
    %p76 = scmp.eq.s32.totalorder %s8, 1
    %p77 = por %p75, %p76
    %p78 = scmp.ne.s32.totalorder %s70, %s73
    %p79 = scmp.eq.s32.totalorder %s8, 0
    %p80 = por %p78, %p79
    %p81 = scmp.ne.s32.totalorder %s70, %s73
    %p82 = scmp.eq.s32.totalorder %s13, 1
    %p83 = por %p81, %p82
    %p84 = scmp.ne.s32.totalorder %s73, %s74
    %p85 = scmp.eq.s32.totalorder %s13, 0
    %p86 = por %p84, %p85
    %p87 = scmp.ne.s32.totalorder %s73, %s74
    %p88 = scmp.eq.s32.totalorder %s14, 1
    %p89 = por %p87, %p88
    %p91 = scmp.ne.s32.totalorder %s74, %s90
    %p92 = scmp.eq.s32.totalorder %s14, 0
    %p93 = por %p91, %p92
    %p94 = scmp.le.s32.totalorder 1, %s8
    %p95 = scmp.lt.s32.totalorder %s8, 3
    %p96 = pnand %p94, %p95
    %p97 = pneg %p96
    // Predicated region
    $region9: #{_lambda_.3} parent=5 // pred_check
      _
    $region10: #{_lambda_.3} parent=5 // pred_check_branch
      %99 = sbr.rel (%p96) target = $region12
    $region11: #{_lambda_.3} parent=5 // pred_region
      %s100 = ssub.s32 %s8, 1
    $region12: #{_lambda_.3} parent=5 // pred_fallthru
      _
    %p101 = scmp.lt.s32.totalorder %s8, 2
    // Predicated region
    $region13: #{_lambda_.3} parent=5 // pred_check
      %p102 = pneg %p101
    $region14: #{_lambda_.3} parent=5 // pred_check_branch
      %104 = sbr.rel (%p102) target = $region16
    $region15: #{_lambda_.3} parent=5 // pred_region
      // Predicated region
      $region17: #{_lambda_.3} parent=15 // pred_check
        %p105 = pneg %p28
      $region18: #{_lambda_.3} parent=15 // pred_check_branch
        %107 = sbr.rel (%p105) target = $region20
      $region19: #{_lambda_.3} parent=15 // pred_region
        %s108 = smul.u32 2, %s8
        %p109 = scmp.lt.s32.totalorder %s108, 3
        %s110 = scalar_select %p109, %s108, 3
        %s111 = smul.addr %s110, 8
        %s112 = scalar_lea.vmem %s0, %s111
        %s113 = smul.u32 2, %s8
      $region20: #{_lambda_.3} parent=15 // pred_fallthru
        _
      // Predicated region
      $region21: #{_lambda_.3} parent=15 // pred_check
        %p114 = pneg %p54
      $region22: #{_lambda_.3} parent=15 // pred_check_branch
        %116 = sbr.rel (%p114) target = $region24
      $region23: #{_lambda_.3} parent=15 // pred_region
        %s117 = smul.u32 2, %s8
        %p118 = scmp.lt.s32.totalorder %s117, 3
        %s119 = scalar_select %p118, %s117, 3
        %s120 = smul.addr %s119, 8
        %s121 = scalar_lea.vmem %s1, %s120
        %s122 = smul.u32 2, %s8
      $region24: #{_lambda_.3} parent=15 // pred_fallthru
        _
    $region16: #{_lambda_.3} parent=5 // pred_fallthru
      _
    %p123 = scmp.le.s32.totalorder 1, %s8
    %p124 = scmp.lt.s32.totalorder %s8, 3
    %p125 = pnand %p123, %p124
    %p126 = pneg %p125
    // Predicated region
    $region25: #{_lambda_.3} parent=5 // pred_check
      _
    $region26: #{_lambda_.3} parent=5 // pred_check_branch
      %128 = sbr.rel (%p125) target = $region28
    $region27: #{_lambda_.3} parent=5 // pred_region
      %s129 = ssub.s32 %s8, 1
      %s130 = smul.u32 2, %s13
      %p131 = scmp.lt.s32.totalorder %s130, 3
      %s132 = scalar_select %p131, %s130, 3
      %s133 = smul.addr %s132, 8
      %s134 = scalar_lea.vmem %s0, %s133
      %p135 = pneg %p34
      %p136 = pneg %p31
      %s137 = smul.u32 2, %s13
      %p138 = scmp.lt.s32.totalorder %s137, 3
      %s139 = scalar_select %p138, %s137, 3
      %s140 = smul.addr %s139, 8
      %s141 = scalar_lea.vmem %s1, %s140
      %p142 = pneg %p60
      %p143 = pneg %p57
      %p144 = pneg %p86
      %p145 = pneg %p83
      %s146 = smul.u32 2, %s13
      %p147 = scmp.lt.s32.totalorder %s146, 3
      %s148 = scalar_select %p147, %s146, 3
      %s149 = smul.addr %s148, 8
      %s150 = scalar_lea.vmem %s2, %s149
      %s151 = smul.u32 2, %s13
      %p152 = scmp.lt.s32.totalorder %s151, 3
      %s153 = scalar_select %p152, %s151, 3
      %s154 = smul.addr %s153, 8
      %s155 = scalar_lea.vmem %s0, %s154
      %s156 = smul.u32 2, %s13
      %s157 = smul.u32 2, %s13
      %p158 = scmp.lt.s32.totalorder %s157, 3
      %s159 = scalar_select %p158, %s157, 3
      %s160 = smul.addr %s159, 8
      %s161 = scalar_lea.vmem %s1, %s160
      %s162 = smul.u32 2, %s13
      %s163 = smul.u32 2, %s13
      %p164 = scmp.lt.s32.totalorder %s163, 3
      %s165 = scalar_select %p164, %s163, 3
      %s166 = smul.addr %s165, 8
      %s167 = scalar_lea.vmem %s2, %s166
      %s168 = smul.u32 2, %s13
      %v169 = vld [vmem:[%s155] sm:$0xff]
      %v170 = vld [vmem:[%s155 + $0x8] sm:$0xff]
      %v171 = vld [vmem:[%s161] sm:$0xff]
      %v172 = vld [vmem:[%s161 + $0x8] sm:$0xff]
      %v173 = vadd.f32 %v169, %v171
      %v174 = vadd.f32 %v170, %v172
      %175 = vst [vmem:[%s167] sm:$0xff] %v173
      %176 = vst [vmem:[%s167 + $0x8] sm:$0xff] %v174
      %s177 = smul.u32 2, %s13
      %p178 = scmp.lt.s32.totalorder %s177, 3
      %s179 = scalar_select %p178, %s177, 3
      %s180 = smul.addr %s179, 8
      %s181 = scalar_lea.vmem %s2, %s180
      // Predicated region
      $region29: #{_lambda_.3} parent=27 // pred_check
        %p182 = pneg %p83
      $region30: #{_lambda_.3} parent=27 // pred_check_branch
        %184 = sbr.rel (%p182) target = $region32
      $region31: #{_lambda_.3} parent=27 // pred_region
        %s185 = smul.u32 2, %s13
      $region32: #{_lambda_.3} parent=27 // pred_fallthru
        _
    $region28: #{_lambda_.3} parent=5 // pred_fallthru
      _
    %p186 = scmp.le.s32.totalorder 2, %s8
    // Predicated region
    $region33: #{_lambda_.3} parent=5 // pred_check
      %p187 = pneg %p186
    $region34: #{_lambda_.3} parent=5 // pred_check_branch
      %189 = sbr.rel (%p187) target = $region36
    $region35: #{_lambda_.3} parent=5 // pred_region
      %s190 = ssub.s32 %s8, 2
      // Predicated region
      $region37: #{_lambda_.3} parent=35 // pred_check
        %p191 = pneg %p89
      $region38: #{_lambda_.3} parent=35 // pred_check_branch
        %193 = sbr.rel (%p191) target = $region40
      $region39: #{_lambda_.3} parent=35 // pred_region
        %s194 = smul.u32 2, %s14
        %p195 = scmp.lt.s32.totalorder %s194, 3
        %s196 = scalar_select %p195, %s194, 3
        %s197 = smul.addr %s196, 8
        %s198 = scalar_lea.vmem %s2, %s197
      $region40: #{_lambda_.3} parent=35 // pred_fallthru
        _
    $region36: #{_lambda_.3} parent=5 // pred_fallthru
      _
  $region6: #{_lambda_.3} parent=0 // loop_footer
    %s12 = sadd.s32 1, %s8
  $region7: #{_lambda_.3} parent=0 // loop_footer_branch
    %7 = sbr.rel target = $region3
  $region8: #{_lambda_.3} parent=0 // loop_exit
    _

</llo_original>
